<compile_context>
chip_gen: v5e
topology: v5e:2x2
jax: 0.10.0
libtpu: 0.0.40
codegen_flags: <defaults>
</compile_context>

<pallas_src>
import jax
import jax.numpy as jnp
from jax.experimental import pallas as pl
from jax.experimental.pallas import tpu as pltpu


def _round_up(v, m):
    return ((v + m - 1) // m) * m


def _pick_tile(dim, target, align):
    """Largest multiple of `align` that divides `dim` and is <= target."""
    t = max(align, min(target, dim))
    t = max(align, (t // align) * align)
    while dim % t:
        t -= align
    return t


def _default_tiles():
    """Per-chip (tm, tn, tk) defaults for large problems (clamped per call)."""
    try:
        kind = jax.devices()[0].device_kind.lower()
    except Exception:  # pragma: no cover - device query failure
        kind = ""
    if "v5" in kind:
        # v5e: 197 TF/s vs ~820 GB/s -> ~240 flop/byte bar; 128 MiB VMEM.
        return 512, 512, 1024
    if "v6" in kind:
        # v6e: 918 TF/s vs ~1.4 TB/s -> ~650 flop/byte bar; 128 MiB VMEM.
        return 1024, 2048, 512
    # v7x (and unknown): 64 MiB VMEM per TC, 3.2 TB/s HBM -> ~310 flop/byte.
    return 512, 1024, 512


def linear_kernel(x_ref, w_ref, b_ref, o_ref, acc_ref):
    """One (tm, tn) output tile; grid axis 2 (K) is the reduction axis."""
    k = pl.program_id(2)

    @pl.when(k == 0)
    def _():
        acc_ref[...] = jnp.zeros_like(acc_ref)

    # bf16 x bf16 -> f32 accumulate on the MXU.
    acc_ref[...] += jnp.dot(x_ref[...], w_ref[...],
                            preferred_element_type=jnp.float32)

    @pl.when(k == pl.num_programs(2) - 1)
    def _():
        # Bias added once per output tile, in f32, then cast to output dtype.
        o_ref[...] = (acc_ref[...] + b_ref[...]).astype(o_ref.dtype)


def prepare_expert_params(weight, bias):
    """One-time layout prep (outside the per-call hot path).

    weight: (feature_out, feature_in) -- PyTorch nn.Linear layout.
    Returns:
      w_t : (K_pad, N_pad) bf16, pre-transposed + zero-padded to 128 lanes.
      b_p : (1, N_pad) f32, zero-padded.
      n   : true (unpadded) feature_out.
    """
    n_out, k_in = weight.shape
    k_pad = _round_up(k_in, 128)
    n_pad = _round_up(n_out, 128)
    w_t = jnp.asarray(weight, jnp.float32).T.astype(jnp.bfloat16)
    w_t = jnp.pad(w_t, ((0, k_pad - k_in), (0, n_pad - n_out)))
    b_p = jnp.pad(jnp.asarray(bias, jnp.float32), (0, n_pad - n_out))
    return w_t, b_p.reshape(1, n_pad), n_out


def basic_expert_forward(x, w_t, bias_p, feature_out=None, *,
                         tm=None, tn=None, tk=None,
                         out_dtype=None, w_buffers=None):
    """y = x @ w_t + bias  (== nn.Linear(x) with pre-prepared params).

    x:      (..., feature_in)  (bf16 passes through with no extra cast pass)
    w_t:    (K_pad, N_pad)     pre-transposed, pre-padded bf16 weight
    bias_p: (1, N_pad)         pre-padded f32 bias
    """
    orig_shape = x.shape
    if x.ndim != 2:
        x = x.reshape(-1, orig_shape[-1])
    M, K = x.shape
    K_pad, N_pad = w_t.shape
    assert K <= K_pad and bias_p.shape == (1, N_pad)
    N = N_pad if feature_out is None else feature_out
    out_dtype = out_dtype or x.dtype

    dtm, dtn, dtk = _default_tiles()
    tm = tm or dtm
    tn = tn or dtn
    tk = tk or dtk

    # --- M tiling. For small M keep the M-grid at exactly one block so every
    #     weight tile is DMA'd from HBM exactly once (weight-BW roofline).
    m_align = 16  # bf16 sublane packing
    M_pad = _round_up(M, m_align)
    if M_pad <= tm:
        tm = M_pad
    else:
        tm = _round_up(tm, m_align)
        M_pad = _round_up(M, tm)

    # --- N / K tiles must divide the (pre-padded) weight dims exactly.
    tn = _pick_tile(N_pad, tn, 128)
    tk = _pick_tile(K_pad, tk, 128)

    # --- Keep both TensorCores busy on v7x: guarantee >= 2 blocks along the
    #     parallel (i, j) axes whenever N allows it (harmless on 1-TC chips).
    if (M_pad // tm) * (N_pad // tn) == 1 and N_pad >= 256:
        tn = _pick_tile(N_pad, N_pad // 2, 128)

    # --- Activations: cast / pad only when actually needed.
    x_p = x if x.dtype == jnp.bfloat16 else x.astype(jnp.bfloat16)
    if M_pad != M or K_pad != K:
        x_p = jnp.pad(x_p, ((0, M_pad - M), (0, K_pad - K)))

    grid = (M_pad // tm, N_pad // tn, K_pad // tk)

    # Optional extra weight buffering for the memory-bound small-M regime
    # (perf knob: keeps the weight DMA stream saturated when compute per
    # step is short).
    w_spec_kwargs = {}
    if w_buffers is not None and w_buffers != 2:
        w_spec_kwargs["pipeline_mode"] = pl.Buffered(w_buffers)
    w_spec = pl.BlockSpec((tk, tn), lambda i, j, k: (k, j), **w_spec_kwargs)

    out_bytes = jnp.dtype(out_dtype).itemsize
    nbuf_w = w_buffers or 2
    # Tile working-set estimate (double-buffered inputs/outputs + f32 acc).
    vmem_est = (2 * tm * tk * 2          # x tiles (bf16)
                + nbuf_w * tk * tn * 2   # weight tiles (bf16)
                + 2 * tn * 4             # bias tiles (f32)
                + 2 * tm * tn * out_bytes  # output tiles
                + tm * tn * 4)           # f32 accumulator scratch
    vmem_limit = int(min(max(3 * vmem_est // 2 + (2 << 20), 16 << 20),
                         56 << 20))      # stay inside v7x's 64 MiB physical

    cost = pl.CostEstimate(
        flops=2 * M_pad * N_pad * K_pad,
        transcendentals=0,
        bytes_accessed=(x_p.size * 2 + w_t.size * 2 + bias_p.size * 4
                        + M_pad * N_pad * out_bytes),
    )

    y_pad = pl.pallas_call(
        linear_kernel,
        out_shape=jax.ShapeDtypeStruct((M_pad, N_pad), out_dtype),
        grid_spec=pltpu.PrefetchScalarGridSpec(
            num_scalar_prefetch=0,
            grid=grid,
            in_specs=[
                pl.BlockSpec((tm, tk), lambda i, j, k: (i, k)),   # x tile
                w_spec,                                           # w_t tile
                pl.BlockSpec((1, tn), lambda i, j, k: (0, j)),    # bias tile
            ],
            out_specs=pl.BlockSpec((tm, tn), lambda i, j, k: (i, j)),
            scratch_shapes=[pltpu.VMEM((tm, tn), jnp.float32)],
        ),
        compiler_params=pltpu.CompilerParams(
            dimension_semantics=("parallel", "parallel", "arbitrary"),
            vmem_limit_bytes=vmem_limit,
        ),
        cost_estimate=cost,
    )(x_p, w_t, bias_p)

    y = y_pad if (M_pad == M and N_pad == N) else y_pad[:M, :N]
    if len(orig_shape) != 2:
        y = y.reshape(*orig_shape[:-1], N)
    return y


if __name__ == "__main__":
    key = jax.random.PRNGKey(0)

    def make_params(k, feature_in, feature_out):
        kw, kb = jax.random.split(k)
        bound = 1.0 / (feature_in ** 0.5)
        weight = jax.random.uniform(kw, (feature_out, feature_in), jnp.float32,
                                    minval=-bound, maxval=bound)
        bias = jax.random.uniform(kb, (feature_out,), jnp.float32,
                                  minval=-bound, maxval=bound)
        return weight, bias

    # ---- Test 1: the BasicExpert spec shapes (f32 in/out, tiny). ----------
    k1, k2, k3, kx1, kx2, kx3 = jax.random.split(key, 6)
    batch, feature_in, feature_out = 8, 32, 64
    weight, bias = make_params(k1, feature_in, feature_out)
    x = jax.random.normal(kx1, (batch, feature_in), jnp.float32)

    w_t, b_p, n_out = prepare_expert_params(weight, bias)  # one-time prep
    y = jax.block_until_ready(basic_expert_forward(x, w_t, b_p, n_out))
    y_ref = x @ weight.T + bias
    assert y.shape == (batch, feature_out)
    assert jnp.allclose(y, y_ref, atol=5e-2, rtol=5e-2), (
        float(jnp.max(jnp.abs(y - y_ref))))

    # ---- Test 2: multi-tile path (bf16 activations/output, split N). ------
    M2, K2, N2 = 256, 1024, 384
    weight2, bias2 = make_params(k2, K2, N2)
    x2 = jax.random.normal(kx2, (M2, K2), jnp.float32).astype(jnp.bfloat16)
    w_t2, b_p2, n_out2 = prepare_expert_params(weight2, bias2)
    y2 = jax.block_until_ready(
        basic_expert_forward(x2, w_t2, b_p2, n_out2, out_dtype=jnp.bfloat16))
    ref2 = (x2.astype(jnp.float32)
            @ weight2.astype(jnp.bfloat16).astype(jnp.float32).T + bias2)
    assert y2.shape == (M2, N2)
    assert jnp.allclose(y2.astype(jnp.float32), ref2, atol=3e-2, rtol=3e-2), (
        float(jnp.max(jnp.abs(y2.astype(jnp.float32) - ref2))))

    # ---- Test 3: small-M / larger-K regime (tm clamped to one M-block). ---
    M3, K3, N3 = 8, 1024, 512
    weight3, bias3 = make_params(k3, K3, N3)
    x3 = jax.random.normal(kx3, (M3, K3), jnp.float32).astype(jnp.bfloat16)
    w_t3, b_p3, n_out3 = prepare_expert_params(weight3, bias3)
    y3 = jax.block_until_ready(
        basic_expert_forward(x3, w_t3, b_p3, n_out3, out_dtype=jnp.bfloat16))
    ref3 = (x3.astype(jnp.float32)
            @ weight3.astype(jnp.bfloat16).astype(jnp.float32).T + bias3)
    assert y3.shape == (M3, N3)
    assert jnp.allclose(y3.astype(jnp.float32), ref3, atol=3e-2, rtol=3e-2), (
        float(jnp.max(jnp.abs(y3.astype(jnp.float32) - ref3))))

    print("KERNEL_OK")
</pallas_src>

<mosaic_0001>
module attributes {stable_mosaic.version = 11 : i64} {
  func.func @linear_kernel(%arg0: i32, %arg1: i32, %arg2: i32, %arg3: memref<16x128xbf16, #tpu.memory_space<vmem>>, %arg4: memref<128x128xbf16, #tpu.memory_space<vmem>>, %arg5: memref<1x128xf32, #tpu.memory_space<vmem>>, %arg6: memref<16x128xf32, #tpu.memory_space<vmem>>, %arg7: memref<16x128xf32, #tpu.memory_space<vmem>>) attributes {dimension_semantics = [#tpu.dimension_semantics<parallel>, #tpu.dimension_semantics<parallel>, #tpu.dimension_semantics<arbitrary>], iteration_bounds = array<i64: 1, 1, 1>, scalar_prefetch = 0 : i64, scratch_operands = 1 : i64, tpu.core_type = #tpu.core_type<tc>, window_params = [{transform_indices = @transform_0, window_bounds = array<i64: 16, 128>}, {transform_indices = @transform_1, window_bounds = array<i64: 128, 128>}, {transform_indices = @transform_2, window_bounds = array<i64: 1, 128>}, {transform_indices = @transform_3, window_bounds = array<i64: 16, 128>}]} {
    %c0_i32 = arith.constant 0 : i32
    %0 = arith.cmpi eq, %arg2, %c0_i32 : i32
    %1 = arith.extui %0 : i1 to i32
    %c0_i32_0 = arith.constant 0 : i32
    %2 = arith.cmpi ne, %1, %c0_i32_0 : i32
    scf.if %2 {
      %cst_10 = arith.constant 0.000000e+00 : f32
      %12 = vector.broadcast %cst_10 : f32 to vector<16x128xf32>
      %c0_11 = arith.constant 0 : index
      %c0_12 = arith.constant 0 : index
      %13 = vector.load %arg7[%c0_11, %c0_12] : memref<16x128xf32, #tpu.memory_space<vmem>>, vector<16x128xf32>
      tpu.vector_store %arg7[%c0_11, %c0_12], %12 {strides = array<i32>} : memref<16x128xf32, #tpu.memory_space<vmem>>, vector<16x128xf32>,
    } else {
    }
    %c0 = arith.constant 0 : index
    %c0_1 = arith.constant 0 : index
    %3 = vector.load %arg7[%c0, %c0_1] : memref<16x128xf32, #tpu.memory_space<vmem>>, vector<16x128xf32>
    %c0_2 = arith.constant 0 : index
    %c0_3 = arith.constant 0 : index
    %4 = vector.load %arg3[%c0_2, %c0_3] : memref<16x128xbf16, #tpu.memory_space<vmem>>, vector<16x128xbf16>
    %c0_4 = arith.constant 0 : index
    %c0_5 = arith.constant 0 : index
    %5 = vector.load %arg4[%c0_4, %c0_5] : memref<128x128xbf16, #tpu.memory_space<vmem>>, vector<128x128xbf16>
    %cst = arith.constant dense<0.000000e+00> : vector<16x128xf32>
    %6 = tpu.matmul %4, %5, %cst {dimension_numbers = #tpu.dot_dimension_numbers<[1], [0], [0], [1], [0, 0, 1, 1], [], []>} : vector<16x128xbf16>, vector<128x128xbf16>, vector<16x128xf32> -> vector<16x128xf32>
    %7 = arith.addf %3, %6 : vector<16x128xf32>
    %c0_6 = arith.constant 0 : index
    %c0_7 = arith.constant 0 : index
    %8 = vector.load %arg7[%c0_6, %c0_7] : memref<16x128xf32, #tpu.memory_space<vmem>>, vector<16x128xf32>
    tpu.vector_store %arg7[%c0_6, %c0_7], %7 {strides = array<i32>} : memref<16x128xf32, #tpu.memory_space<vmem>>, vector<16x128xf32>,
    %c0_i32_8 = arith.constant 0 : i32
    %9 = arith.cmpi eq, %arg2, %c0_i32_8 : i32
    %10 = arith.extui %9 : i1 to i32
    %c0_i32_9 = arith.constant 0 : i32
    %11 = arith.cmpi ne, %10, %c0_i32_9 : i32
    scf.if %11 {
      %c0_10 = arith.constant 0 : index
      %c0_11 = arith.constant 0 : index
      %12 = vector.load %arg7[%c0_10, %c0_11] : memref<16x128xf32, #tpu.memory_space<vmem>>, vector<16x128xf32>
      %c0_12 = arith.constant 0 : index
      %c0_13 = arith.constant 0 : index
      %13 = vector.load %arg5[%c0_12, %c0_13] : memref<1x128xf32, #tpu.memory_space<vmem>>, vector<1x128xf32>
      %14 = vector.broadcast %13 : vector<1x128xf32> to vector<16x128xf32>
      %15 = arith.addf %12, %14 : vector<16x128xf32>
      %c0_14 = arith.constant 0 : index
      %c0_15 = arith.constant 0 : index
      %16 = vector.load %arg6[%c0_14, %c0_15] : memref<16x128xf32, #tpu.memory_space<vmem>>, vector<16x128xf32>
      tpu.vector_store %arg6[%c0_14, %c0_15], %15 {strides = array<i32>} : memref<16x128xf32, #tpu.memory_space<vmem>>, vector<16x128xf32>,
    } else {
    }
    return
  }
  func.func @transform_0(%arg0: i32, %arg1: i32, %arg2: i32) -> (i32, i32) {
    %c0_i32 = arith.constant 0 : i32
    return %arg0, %arg2 : i32, i32
  }
  func.func @transform_1(%arg0: i32, %arg1: i32, %arg2: i32) -> (i32, i32) {
    %c0_i32 = arith.constant 0 : i32
    return %arg2, %arg1 : i32, i32
  }
  func.func @transform_2(%arg0: i32, %arg1: i32, %arg2: i32) -> (i32, i32) {
    %c0_i32 = arith.constant 0 : i32
    %c0_i32_0 = arith.constant 0 : i32
    return %c0_i32, %arg1 : i32, i32
  }
  func.func @transform_3(%arg0: i32, %arg1: i32, %arg2: i32) -> (i32, i32) {
    %c0_i32 = arith.constant 0 : i32
    return %arg0, %arg1 : i32, i32
  }
}

</mosaic_0001>

<llo_original>
// kernel: tpu_custom_call.1
$region0: #{tpu_custom_call.1}
  #allocation0 [shape = 'u32[]', space=smem, size = 0x4, offset = 0x4, fixed_abs, tag = 'smem constant byte address 0x4 - core index']
  #allocation1 [shape = 'u32[72,128]{1,0:T(1,128)}', space=vmem, size = 0x9000, scoped, tag = 'internal scratch']
  #allocation2 [shape = 'f32[16,128]{1,0:T(8,128)}', space=vmem, size = 0x2000, scoped, tag = 'scratch operand']
  %s0 = inlined_call_operand.hbm [shape: bf16[16,128], index: 0, kind: input, shape index: {}]
  %s1 = inlined_call_operand.hbm [shape: bf16[128,128], index: 1, kind: input, shape index: {}]
  %s2 = inlined_call_operand.vmem [shape: f32[1,128], index: 2, kind: input, shape index: {}]
  %s3 = inlined_call_operand.hbm [shape: f32[16,128], index: 3, kind: output, shape index: {}]
  %s4 = sld [smem:[#allocation0]]
  $region38: #{tpu_custom_call.1} parent=0
    _
  %s6 = ssub.s32 1, %s4
  %s7 = scalar_select 0, %s6, %s4
  $region1: #{tpu_custom_call.1} parent=0
    #allocation3 [shape = 'u8[4096]{0}', space=vmem, size = 0x1000, scoped, tag = 'input window, operand 0, single buffered']
    #allocation4 [shape = 's32[1]{0}', space=sflag, size = 0x4, scoped, tag = 'scoped memory for tpu_custom_call.1']
    #allocation5 [shape = 's32[1]{0}', space=sflag, size = 0x4, scoped, tag = 'scoped memory for tpu_custom_call.1']
    #allocation6 [shape = 'u8[32768]{0}', space=vmem, size = 0x8000, scoped, tag = 'input window, operand 1, single buffered']
    #allocation7 [shape = 's32[1]{0}', space=sflag, size = 0x4, scoped, tag = 'scoped memory for tpu_custom_call.1']
    #allocation8 [shape = 'u8[8192]{0}', space=vmem, size = 0x2000, scoped, tag = 'output window, operand 0, single buffered']
    %8 = vsyncpa [#allocation4], 0
    %9 = vsyncpa [#allocation7], 0
    %10 = vsyncpa [#allocation5], 0
    // Predicated region
    $region2: #{tpu_custom_call.1} parent=1 // pred_check
      _
    $region3: #{tpu_custom_call.1} parent=1 // pred_check_branch
      %12 = sbr.rel (0) target = $region5
    $region4: #{tpu_custom_call.1} parent=1 // pred_region
      %14 = vsyncadd [#allocation4], 0
      %s15 = sshll.u32 %s0, 4
      %s16 = int_to_ptr.hbm [resolvable:$true] %s15
      %s17 = sshll.u32 [#allocation3], 4
      %s18 = int_to_ptr.vmem [resolvable:$true] %s17
      %23 = dma.hbm_to_vmem [thread:$0]  %s16, 128, %s18, [#allocation4], 64, 64, 4
    $region5: #{tpu_custom_call.1} parent=1 // pred_fallthru
      _
    // Predicated region
    $region6: #{tpu_custom_call.1} parent=1 // pred_check
      _
    $region7: #{tpu_custom_call.1} parent=1 // pred_check_branch
      %25 = sbr.rel (0) target = $region9
    $region8: #{tpu_custom_call.1} parent=1 // pred_region
      %27 = vsyncadd [#allocation7], 0
      %s28 = sshll.u32 %s1, 4
      %s29 = int_to_ptr.hbm [resolvable:$true] %s28
      %s30 = sshll.u32 [#allocation6], 4
      %s31 = int_to_ptr.vmem [resolvable:$true] %s30
      %36 = dma.hbm_to_vmem [thread:$0]  %s29, 1024, %s31, [#allocation7], 64, 64, 4
    $region9: #{tpu_custom_call.1} parent=1 // pred_fallthru
      _
    // Predicated region
    $region10: #{tpu_custom_call.1} parent=1 // pred_check
      _
    $region11: #{tpu_custom_call.1} parent=1 // pred_check_branch
      %38 = sbr.rel (0) target = $region13
    $region12: #{tpu_custom_call.1} parent=1 // pred_region
      _
    $region13: #{tpu_custom_call.1} parent=1 // pred_fallthru
      _
    // Predicated region
    $region14: #{tpu_custom_call.1} parent=1 // pred_check
      _
    $region15: #{tpu_custom_call.1} parent=1 // pred_check_branch
      %40 = sbr.rel (0) target = $region17
    $region16: #{tpu_custom_call.1} parent=1 // pred_region
      %42 = dma.done [#allocation4], 128
    $region17: #{tpu_custom_call.1} parent=1 // pred_fallthru
      _
    // Predicated region
    $region18: #{tpu_custom_call.1} parent=1 // pred_check
      _
    $region19: #{tpu_custom_call.1} parent=1 // pred_check_branch
      %44 = sbr.rel (0) target = $region21
    $region20: #{tpu_custom_call.1} parent=1 // pred_region
      %46 = dma.done [#allocation7], 1024
    $region21: #{tpu_custom_call.1} parent=1 // pred_fallthru
      _
    %p47 = scmp.eq.s32.totalorder 0, 0
    // Predicated region
    $region22: #{tpu_custom_call.1} parent=1 // pred_check
      %p48 = pneg %p47
    $region23: #{tpu_custom_call.1} parent=1 // pred_check_branch
      %50 = sbr.rel (%p48) target = $region25
    $region24: #{tpu_custom_call.1} parent=1 // pred_region
      %51 = vst [vmem:[#allocation2] sm:$0xff] 0.0
      %52 = vst [vmem:[#allocation2 + $0x8] sm:$0xff] 0.0
    $region25: #{tpu_custom_call.1} parent=1 // pred_fallthru
      _
    %v53 = vld [vmem:[#allocation2] sm:$0xff]
    %v54 = vld [vmem:[#allocation2 + $0x8] sm:$0xff]
    %v55 = vld [vmem:[#allocation3] sm:$0xf]
    %v56 = vld [vmem:[#allocation3 + $0x4] sm:$0xf]
    %v57 = vld [vmem:[#allocation6] sm:$0xf]
    %v58 = vld [vmem:[#allocation6 + $0x4] sm:$0xf]
    %v59 = vld [vmem:[#allocation6 + $0x8] sm:$0xf]
    %v60 = vld [vmem:[#allocation6 + $0xc] sm:$0xf]
    %v61 = vld [vmem:[#allocation6 + $0x10] sm:$0xf]
    %v62 = vld [vmem:[#allocation6 + $0x14] sm:$0xf]
    %v63 = vld [vmem:[#allocation6 + $0x18] sm:$0xf]
    %v64 = vld [vmem:[#allocation6 + $0x1c] sm:$0xf]
    %v65 = vld [vmem:[#allocation6 + $0x20] sm:$0xf]
    %v66 = vld [vmem:[#allocation6 + $0x24] sm:$0xf]
    %v67 = vld [vmem:[#allocation6 + $0x28] sm:$0xf]
    %v68 = vld [vmem:[#allocation6 + $0x2c] sm:$0xf]
    %v69 = vld [vmem:[#allocation6 + $0x30] sm:$0xf]
    %v70 = vld [vmem:[#allocation6 + $0x34] sm:$0xf]
    %v71 = vld [vmem:[#allocation6 + $0x38] sm:$0xf]
    %v72 = vld [vmem:[#allocation6 + $0x3c] sm:$0xf]
    %v75 = vunpack.c.l.b16 %v55
    %v76 = vunpack.c.l.b16 %v56
    %v77 = vpack.c.b16 %v76, %v75
    %v95 = vunpack.c.l.b16 %v57
    %v96 = vunpack.c.l.b16 %v58
    %v97 = vunpack.c.l.b16 %v59
    %v98 = vunpack.c.l.b16 %v60
    %v99 = vunpack.c.l.b16 %v61
    %v100 = vunpack.c.l.b16 %v62
    %v101 = vunpack.c.l.b16 %v63
    %v102 = vunpack.c.l.b16 %v64
    %v103 = vunpack.c.l.b16 %v65
    %v104 = vunpack.c.l.b16 %v66
    %v105 = vunpack.c.l.b16 %v67
    %v106 = vunpack.c.l.b16 %v68
    %v107 = vunpack.c.l.b16 %v69
    %v108 = vunpack.c.l.b16 %v70
    %v109 = vunpack.c.l.b16 %v71
    %v110 = vunpack.c.l.b16 %v72
    %v111 = vpack.c.b16 %v96, %v95
    %v112 = vpack.c.b16 %v98, %v97
    %v113 = vpack.c.b16 %v100, %v99
    %v114 = vpack.c.b16 %v102, %v101
    %v115 = vpack.c.b16 %v104, %v103
    %v116 = vpack.c.b16 %v106, %v105
    %v117 = vpack.c.b16 %v108, %v107
    %v118 = vpack.c.b16 %v110, %v109
    %127 = vmatpush.bf16.msra.mxu0 %v118
    %128 = vmatpush.bf16.msra.mxu0 %v117
    %129 = vmatpush.bf16.msra.mxu0 %v116
    %130 = vmatpush.bf16.msra.mxu0 %v115
    %131 = vmatpush.bf16.msra.mxu0 %v114
    %132 = vmatpush.bf16.msra.mxu0 %v113
    %133 = vmatpush.bf16.msra.mxu0 %v112
    %134 = vmatpush.bf16.msra.mxu0 %v111
    %135 = vmatmul.bf16.gmra.mxu0 %v77
    %v136 = vpop.f32.mrf.mxu0
    %v137 = vadd.f32 0.0, %v136
    %v138 = vpop.f32.mrf.mxu0
    %v139 = vadd.f32 0.0, %v138
    %140 = vdwg.mxu0
    %v141 = vadd.f32 %v53, %v137
    %v142 = vadd.f32 %v54, %v139
    %143 = vst [vmem:[#allocation2] sm:$0xff] %v141
    %144 = vst [vmem:[#allocation2 + $0x8] sm:$0xff] %v142
    // Predicated region
    $region26: #{tpu_custom_call.1} parent=1 // pred_check
      %p145 = pneg %p47
    $region27: #{tpu_custom_call.1} parent=1 // pred_check_branch
      %147 = sbr.rel (%p145) target = $region29
    $region28: #{tpu_custom_call.1} parent=1 // pred_region
      %v148 = vld [vmem:[#allocation2] sm:$0xff]
      %v149 = vld [vmem:[#allocation2 + $0x8] sm:$0xff]
      %v150 = vld [vmem:[%s2] sm:$0x1]
      %v152 = vperm.slane %v150, 0
      %v154 = vadd.f32 %v148, %v152
      %v155 = vadd.f32 %v149, %v152
      %156 = vst [vmem:[#allocation8] sm:$0xff] %v154
      %157 = vst [vmem:[#allocation8 + $0x8] sm:$0xff] %v155
    $region29: #{tpu_custom_call.1} parent=1 // pred_fallthru
      _
    // Predicated region
    $region30: #{tpu_custom_call.1} parent=1 // pred_check
      _
    $region31: #{tpu_custom_call.1} parent=1 // pred_check_branch
      %159 = sbr.rel (0) target = $region33
    $region32: #{tpu_custom_call.1} parent=1 // pred_region
      %161 = vsyncadd [#allocation5], 0
      %s162 = sshll.u32 [#allocation8], 4
      %s163 = int_to_ptr.vmem [resolvable:$true] %s162
      %s164 = sshll.u32 %s3, 4
      %s165 = int_to_ptr.hbm [resolvable:$true] %s164
      %170 = dma.vmem_to_hbm [thread:$0]  %s163, 256, %s165, [#allocation5], 128, 128, 8
    $region33: #{tpu_custom_call.1} parent=1 // pred_fallthru
      _
    // Predicated region
    $region34: #{tpu_custom_call.1} parent=1 // pred_check
      _
    $region35: #{tpu_custom_call.1} parent=1 // pred_check_branch
      %172 = sbr.rel (0) target = $region37
    $region36: #{tpu_custom_call.1} parent=1 // pred_region
      %174 = dma.done [#allocation5], 256
    $region37: #{tpu_custom_call.1} parent=1 // pred_fallthru
      _
    %175 = vsyncpa [#allocation4], 1
    %176 = vsyncpa [#allocation7], 1
    %177 = vsyncpa [#allocation5], 1

</llo_original>
